<compile_context>
chip_gen: v7x
topology: tpu7x:2x2x1
jax: 0.10.0
libtpu: 0.0.40
codegen_flags: <defaults>
</compile_context>

<pallas_src>
import functools

import jax
import jax.numpy as jnp
import numpy as np
from jax.experimental import pallas as pl
from jax.experimental.pallas import tpu as pltpu


# --------------------- kernel A: VMEM-resident word table --------------------
def _embeddings_kernel_vmem(TILE_S, unroll,
                            ids_ref,      # SMEM (B, S) int32  [scalar prefetch]
                            word_ref,     # VMEM (V, D) f32    (full table, resident)
                            pos_ref,      # VMEM (TILE_S, D) f32
                            gamma_ref,    # VMEM (1, D) f32
                            beta_ref,     # VMEM (1, D) f32
                            out_ref,      # VMEM (TILE_S, D) f32
                            wemb_ref):    # VMEM (TILE_S, D) f32
    s_idx = pl.program_id(0)
    b = pl.program_id(1)
    s0 = s_idx * TILE_S
    D = out_ref.shape[-1]

    # Gather rows of the on-chip table straight into the word-emb output block.
    def gather(t, carry):
        row = ids_ref[b, s0 + t]
        wemb_ref[pl.ds(t, 1), :] = word_ref[pl.ds(row, 1), :]
        return carry

    jax.lax.fori_loop(0, TILE_S, gather, 0, unroll=unroll)

    # Add positional embeddings + fused LayerNorm (two-pass variance).
    we = wemb_ref[...]                                  # (TILE_S, D)
    x = we + pos_ref[...]
    inv_d = 1.0 / D
    mean = jnp.sum(x, axis=-1, keepdims=True) * inv_d
    diff = x - mean
    var = jnp.sum(diff * diff, axis=-1, keepdims=True) * inv_d
    inv = jax.lax.rsqrt(var + 1e-12)
    out_ref[...] = diff * inv * gamma_ref[...] + beta_ref[...]
    # TODO(synk): dropout is identity here (eval mode / p=0.0); training-mode
    # dropout would need pltpu.prng_seed + pltpu.prng_random_bits.


# --------------------- kernel B: HBM word table + DMA ring -------------------
def _embeddings_kernel_hbm(TILE_S, n_inflight,
                           ids_ref,      # SMEM (B, S) int32  [scalar prefetch]
                           word_hbm,     # HBM  (V, D) f32    [memory_space=ANY]
                           pos_ref,      # VMEM (TILE_S, D) f32
                           gamma_ref,    # VMEM (1, D) f32
                           beta_ref,     # VMEM (1, D) f32
                           out_ref,      # VMEM (TILE_S, D) f32
                           wemb_ref,     # VMEM (TILE_S, D) f32
                           sems):        # DMA semaphores (n_inflight,)
    s_idx = pl.program_id(0)
    b = pl.program_id(1)
    s0 = s_idx * TILE_S
    D = out_ref.shape[-1]

    # Row DMAs land directly in wemb_ref (no scratch, no VMEM->VMEM copy).
    def issue(t, row):
        pltpu.make_async_copy(word_hbm.at[pl.ds(row, 1), :],
                              wemb_ref.at[pl.ds(t, 1), :],
                              sems.at[t % n_inflight]).start()

    @pl.loop(0, n_inflight)
    def _prime(t):
        issue(t, ids_ref[b, s0 + t])

    @pl.loop(0, TILE_S)
    def _drain(t):
        # Hoist the SMEM id read for the next prefetch ABOVE the wait
        # (.wait() breaks SMEM sst->sld forwarding). Clamp keeps the read
        # in-bounds; the pl.when below gates the actual issue.
        nxt = jnp.minimum(t + n_inflight, TILE_S - 1)
        row_next = ids_ref[b, s0 + nxt]
        # NOTE: wait descriptor reconstructs the copy; only the shape / byte
        # count / semaphore need to match the started copy, so the src slice
        # is a placeholder.
        pltpu.make_async_copy(word_hbm.at[pl.ds(0, 1), :],
                              wemb_ref.at[pl.ds(t, 1), :],
                              sems.at[t % n_inflight]).wait()

        @pl.when(t + n_inflight < TILE_S)
        def _():
            issue(t + n_inflight, row_next)

    we = wemb_ref[...]
    x = we + pos_ref[...]
    inv_d = 1.0 / D
    mean = jnp.sum(x, axis=-1, keepdims=True) * inv_d
    diff = x - mean
    var = jnp.sum(diff * diff, axis=-1, keepdims=True) * inv_d
    inv = jax.lax.rsqrt(var + 1e-12)
    out_ref[...] = diff * inv * gamma_ref[...] + beta_ref[...]


# ------------------------------ wrapper --------------------------------------
def _pick_seq_tile(S, max_tile):
    """Largest tile <= max_tile that divides S and is sublane-friendly."""
    for t in range(max(1, min(S, max_tile)), 0, -1):
        if S % t == 0 and (t % 8 == 0 or t == S):
            return t
    return S


def embeddings_forward(input_ids, word_table, pos_table, ln_gamma, ln_beta):
    """Returns (embeddings, word_embeddings), both (B, S, D) float32."""
    B, S = input_ids.shape
    V, D = word_table.shape
    n_pos = pos_table.shape[0]
    assert S <= n_pos, "sequence longer than positional table"

    # Guard against out-of-range ids (would otherwise drive OOB loads/DMAs).
    ids = jnp.clip(input_ids.astype(jnp.int32), 0, V - 1)
    pos_used = pos_table[:S]                       # only the rows we need

    # ---- derive tiling / memory strategy from the chip's VMEM capacity ------
    try:
        vmem_cap = int(pltpu.get_tpu_info().vmem_capacity_bytes)
    except Exception:
        vmem_cap = 64 << 20                        # conservative (v7x per-TC)
    budget = int(vmem_cap * 0.8)

    table_res_bytes = 2 * V * D * 4                # BlockSpec double-buffers
    use_vmem_table = table_res_bytes <= budget // 2

    tile_budget = budget - (table_res_bytes if use_vmem_table else 0)
    per_row_bytes = 6 * D * 4                      # pos + 2 outputs, double-buffered
    max_tile = max(1, min(1024, tile_budget // per_row_bytes))
    TILE_S = _pick_seq_tile(S, max_tile)

    needed = (table_res_bytes if use_vmem_table else 0) \
        + 6 * TILE_S * D * 4 + 4 * D * 4
    vmem_limit = int(min(vmem_cap, max(needed + (8 << 20), 32 << 20)))

    grid = (S // TILE_S, B)                        # batch innermost: pos block
                                                   # (and table) reused, not re-DMA'd
    pos_spec = pl.BlockSpec((TILE_S, D), lambda s, b, ids: (s, 0))
    gb_spec = pl.BlockSpec((1, D), lambda s, b, ids: (0, 0))
    out_spec = pl.BlockSpec((None, TILE_S, D), lambda s, b, ids: (b, s, 0))

    if use_vmem_table:
        kernel = functools.partial(_embeddings_kernel_vmem, TILE_S,
                                   min(8, TILE_S))
        word_spec = pl.BlockSpec((V, D), lambda s, b, ids: (0, 0))  # resident
        scratch = []
    else:
        n_inflight = min(16, TILE_S)
        kernel = functools.partial(_embeddings_kernel_hbm, TILE_S, n_inflight)
        word_spec = pl.BlockSpec(memory_space=pl.ANY)               # stays in HBM
        scratch = [pltpu.SemaphoreType.DMA((n_inflight,))]

    grid_spec = pltpu.PrefetchScalarGridSpec(
        num_scalar_prefetch=1,                     # input_ids -> SMEM
        grid=grid,
        in_specs=[word_spec, pos_spec, gb_spec, gb_spec],
        out_specs=(out_spec, out_spec),
        scratch_shapes=scratch,
    )

    out_shapes = (
        jax.ShapeDtypeStruct((B, S, D), jnp.float32),
        jax.ShapeDtypeStruct((B, S, D), jnp.float32),
    )

    return pl.pallas_call(
        kernel,
        out_shape=out_shapes,
        grid_spec=grid_spec,
        compiler_params=pltpu.CompilerParams(
            dimension_semantics=("parallel", "parallel"),
            vmem_limit_bytes=vmem_limit),
    )(ids, word_table, pos_used,
      ln_gamma.reshape(1, D), ln_beta.reshape(1, D))


# ------------------------- parameter construction ---------------------------
def make_sinusoidal_table(n_pos, dim):
    """Matches create_sinusoidal_embeddings from the PyTorch module."""
    position_enc = np.array(
        [[pos / np.power(10000, 2 * (j // 2) / dim) for j in range(dim)]
         for pos in range(n_pos)],
        dtype=np.float64)
    out = np.zeros((n_pos, dim), dtype=np.float32)
    out[:, 0::2] = np.sin(position_enc[:, 0::2])
    out[:, 1::2] = np.cos(position_enc[:, 1::2])
    return jnp.asarray(out)


# ------------------------------ reference -----------------------------------
def reference_forward(input_ids, word_table, pos_table, gamma, beta):
    we = word_table[input_ids]                              # (B, S, D)
    S = input_ids.shape[1]
    pe = pos_table[jnp.arange(S)][None, :, :]               # (1, S, D)
    x = we + pe
    mean = jnp.mean(x, axis=-1, keepdims=True)
    var = jnp.mean((x - mean) ** 2, axis=-1, keepdims=True)
    y = (x - mean) / jnp.sqrt(var + 1e-12) * gamma + beta
    return y, we


# --------------------------------- main --------------------------------------
if __name__ == "__main__":
    # Small, module-consistent shapes (lane-dense hidden dim).
    vocab_size = 64
    dim = 128
    pad_token_id = 0
    max_position_embeddings = 16
    batch = 2
    seq = 8

    key = jax.random.PRNGKey(0)
    k_ids, k_word = jax.random.split(key)

    # nn.Embedding default init ~ N(0, 1); padding_idx row zeroed.
    word_table = jax.random.normal(k_word, (vocab_size, dim), dtype=jnp.float32)
    word_table = word_table.at[pad_token_id].set(0.0)

    # sinusoidal_pos_embds=True
    pos_table = make_sinusoidal_table(max_position_embeddings, dim)

    # LayerNorm defaults
    ln_gamma = jnp.ones((dim,), dtype=jnp.float32)
    ln_beta = jnp.zeros((dim,), dtype=jnp.float32)

    input_ids = jax.random.randint(k_ids, (batch, seq), 0, vocab_size,
                                   dtype=jnp.int32)

    emb, wemb = embeddings_forward(input_ids, word_table, pos_table,
                                   ln_gamma, ln_beta)
    emb = jax.block_until_ready(emb)
    wemb = jax.block_until_ready(wemb)

    ref_emb, ref_wemb = reference_forward(input_ids, word_table, pos_table,
                                          ln_gamma, ln_beta)
    assert emb.shape == (batch, seq, dim) and wemb.shape == (batch, seq, dim)
    np.testing.assert_allclose(np.asarray(wemb), np.asarray(ref_wemb),
                               rtol=1e-5, atol=1e-5)
    np.testing.assert_allclose(np.asarray(emb), np.asarray(ref_emb),
                               rtol=1e-4, atol=1e-5)
    print("KERNEL_OK")
</pallas_src>

<mosaic_0001>
module attributes {stable_mosaic.version = 11 : i64} {
  func.func @_embeddings_kernel_vmem(%arg0: i32, %arg1: i32, %arg2: memref<2x8xi32, #tpu.memory_space<smem>>, %arg3: memref<64x128xf32, #tpu.memory_space<vmem>>, %arg4: memref<8x128xf32, #tpu.memory_space<vmem>>, %arg5: memref<1x128xf32, #tpu.memory_space<vmem>>, %arg6: memref<1x128xf32, #tpu.memory_space<vmem>>, %arg7: memref<1x8x128xf32, #tpu.memory_space<vmem>>, %arg8: memref<1x8x128xf32, #tpu.memory_space<vmem>>) attributes {dimension_semantics = [#tpu.dimension_semantics<parallel>, #tpu.dimension_semantics<parallel>], iteration_bounds = array<i64: 1, 2>, scalar_prefetch = 1 : i64, scratch_operands = 0 : i64, tpu.core_type = #tpu.core_type<tc>, window_params = [{pipeline_mode = #tpu.pipeline_mode<synchronous>, transform_indices = @transform_0, window_bounds = array<i64: 64, 128>}, {transform_indices = @transform_1, window_bounds = array<i64: 8, 128>}, {pipeline_mode = #tpu.pipeline_mode<synchronous>, transform_indices = @transform_2, window_bounds = array<i64: 1, 128>}, {pipeline_mode = #tpu.pipeline_mode<synchronous>, transform_indices = @transform_3, window_bounds = array<i64: 1, 128>}, {transform_indices = @transform_4, window_bounds = array<i64: 1, 8, 128>}, {transform_indices = @transform_5, window_bounds = array<i64: 1, 8, 128>}]} {
    %c8_i32 = arith.constant 8 : i32
    %0 = arith.muli %arg0, %c8_i32 : i32
    %c0_i32 = arith.constant 0 : i32
    %1 = arith.addi %0, %c0_i32 : i32
    %2 = arith.index_cast %arg1 : i32 to index
    %3 = arith.index_cast %1 : i32 to index
    %4 = memref.load %arg2[%2, %3] : memref<2x8xi32, #tpu.memory_space<smem>>
    %5 = arith.index_cast %4 : i32 to index
    %c0 = arith.constant 0 : index
    %6 = vector.load %arg3[%5, %c0] : memref<64x128xf32, #tpu.memory_space<vmem>>, vector<1x128xf32>
    %c0_0 = arith.constant 0 : index
    %7 = arith.index_cast %c0_i32 : i32 to index
    %c0_1 = arith.constant 0 : index
    %8 = vector.load %arg8[%c0_0, %7, %c0_1] : memref<1x8x128xf32, #tpu.memory_space<vmem>>, vector<1x1x128xf32>
    %9 = vector.shape_cast %8 : vector<1x1x128xf32> to vector<1x128xf32>
    %10 = vector.shape_cast %6 : vector<1x128xf32> to vector<1x1x128xf32>
    tpu.vector_store %arg8[%c0_0, %7, %c0_1], %10 {strides = array<i32>} : memref<1x8x128xf32, #tpu.memory_space<vmem>>, vector<1x1x128xf32>,
    %c1_i32 = arith.constant 1 : i32
    %11 = arith.addi %0, %c1_i32 : i32
    %12 = arith.index_cast %arg1 : i32 to index
    %13 = arith.index_cast %11 : i32 to index
    %14 = memref.load %arg2[%12, %13] : memref<2x8xi32, #tpu.memory_space<smem>>
    %15 = arith.index_cast %14 : i32 to index
    %c0_2 = arith.constant 0 : index
    %16 = vector.load %arg3[%15, %c0_2] : memref<64x128xf32, #tpu.memory_space<vmem>>, vector<1x128xf32>
    %c0_3 = arith.constant 0 : index
    %17 = arith.index_cast %c1_i32 : i32 to index
    %c0_4 = arith.constant 0 : index
    %18 = vector.load %arg8[%c0_3, %17, %c0_4] : memref<1x8x128xf32, #tpu.memory_space<vmem>>, vector<1x1x128xf32>
    %19 = vector.shape_cast %18 : vector<1x1x128xf32> to vector<1x128xf32>
    %20 = vector.shape_cast %16 : vector<1x128xf32> to vector<1x1x128xf32>
    tpu.vector_store %arg8[%c0_3, %17, %c0_4], %20 {strides = array<i32>} : memref<1x8x128xf32, #tpu.memory_space<vmem>>, vector<1x1x128xf32>,
    %c2_i32 = arith.constant 2 : i32
    %21 = arith.addi %0, %c2_i32 : i32
    %22 = arith.index_cast %arg1 : i32 to index
    %23 = arith.index_cast %21 : i32 to index
    %24 = memref.load %arg2[%22, %23] : memref<2x8xi32, #tpu.memory_space<smem>>
    %25 = arith.index_cast %24 : i32 to index
    %c0_5 = arith.constant 0 : index
    %26 = vector.load %arg3[%25, %c0_5] : memref<64x128xf32, #tpu.memory_space<vmem>>, vector<1x128xf32>
    %c0_6 = arith.constant 0 : index
    %27 = arith.index_cast %c2_i32 : i32 to index
    %c0_7 = arith.constant 0 : index
    %28 = vector.load %arg8[%c0_6, %27, %c0_7] : memref<1x8x128xf32, #tpu.memory_space<vmem>>, vector<1x1x128xf32>
    %29 = vector.shape_cast %28 : vector<1x1x128xf32> to vector<1x128xf32>
    %30 = vector.shape_cast %26 : vector<1x128xf32> to vector<1x1x128xf32>
    tpu.vector_store %arg8[%c0_6, %27, %c0_7], %30 {strides = array<i32>} : memref<1x8x128xf32, #tpu.memory_space<vmem>>, vector<1x1x128xf32>,
    %c3_i32 = arith.constant 3 : i32
    %31 = arith.addi %0, %c3_i32 : i32
    %32 = arith.index_cast %arg1 : i32 to index
    %33 = arith.index_cast %31 : i32 to index
    %34 = memref.load %arg2[%32, %33] : memref<2x8xi32, #tpu.memory_space<smem>>
    %35 = arith.index_cast %34 : i32 to index
    %c0_8 = arith.constant 0 : index
    %36 = vector.load %arg3[%35, %c0_8] : memref<64x128xf32, #tpu.memory_space<vmem>>, vector<1x128xf32>
    %c0_9 = arith.constant 0 : index
    %37 = arith.index_cast %c3_i32 : i32 to index
    %c0_10 = arith.constant 0 : index
    %38 = vector.load %arg8[%c0_9, %37, %c0_10] : memref<1x8x128xf32, #tpu.memory_space<vmem>>, vector<1x1x128xf32>
    %39 = vector.shape_cast %38 : vector<1x1x128xf32> to vector<1x128xf32>
    %40 = vector.shape_cast %36 : vector<1x128xf32> to vector<1x1x128xf32>
    tpu.vector_store %arg8[%c0_9, %37, %c0_10], %40 {strides = array<i32>} : memref<1x8x128xf32, #tpu.memory_space<vmem>>, vector<1x1x128xf32>,
    %c4_i32 = arith.constant 4 : i32
    %41 = arith.addi %0, %c4_i32 : i32
    %42 = arith.index_cast %arg1 : i32 to index
    %43 = arith.index_cast %41 : i32 to index
    %44 = memref.load %arg2[%42, %43] : memref<2x8xi32, #tpu.memory_space<smem>>
    %45 = arith.index_cast %44 : i32 to index
    %c0_11 = arith.constant 0 : index
    %46 = vector.load %arg3[%45, %c0_11] : memref<64x128xf32, #tpu.memory_space<vmem>>, vector<1x128xf32>
    %c0_12 = arith.constant 0 : index
    %47 = arith.index_cast %c4_i32 : i32 to index
    %c0_13 = arith.constant 0 : index
    %48 = vector.load %arg8[%c0_12, %47, %c0_13] : memref<1x8x128xf32, #tpu.memory_space<vmem>>, vector<1x1x128xf32>
    %49 = vector.shape_cast %48 : vector<1x1x128xf32> to vector<1x128xf32>
    %50 = vector.shape_cast %46 : vector<1x128xf32> to vector<1x1x128xf32>
    tpu.vector_store %arg8[%c0_12, %47, %c0_13], %50 {strides = array<i32>} : memref<1x8x128xf32, #tpu.memory_space<vmem>>, vector<1x1x128xf32>,
    %c5_i32 = arith.constant 5 : i32
    %51 = arith.addi %0, %c5_i32 : i32
    %52 = arith.index_cast %arg1 : i32 to index
    %53 = arith.index_cast %51 : i32 to index
    %54 = memref.load %arg2[%52, %53] : memref<2x8xi32, #tpu.memory_space<smem>>
    %55 = arith.index_cast %54 : i32 to index
    %c0_14 = arith.constant 0 : index
    %56 = vector.load %arg3[%55, %c0_14] : memref<64x128xf32, #tpu.memory_space<vmem>>, vector<1x128xf32>
    %c0_15 = arith.constant 0 : index
    %57 = arith.index_cast %c5_i32 : i32 to index
    %c0_16 = arith.constant 0 : index
    %58 = vector.load %arg8[%c0_15, %57, %c0_16] : memref<1x8x128xf32, #tpu.memory_space<vmem>>, vector<1x1x128xf32>
    %59 = vector.shape_cast %58 : vector<1x1x128xf32> to vector<1x128xf32>
    %60 = vector.shape_cast %56 : vector<1x128xf32> to vector<1x1x128xf32>
    tpu.vector_store %arg8[%c0_15, %57, %c0_16], %60 {strides = array<i32>} : memref<1x8x128xf32, #tpu.memory_space<vmem>>, vector<1x1x128xf32>,
    %c6_i32 = arith.constant 6 : i32
    %61 = arith.addi %0, %c6_i32 : i32
    %62 = arith.index_cast %arg1 : i32 to index
    %63 = arith.index_cast %61 : i32 to index
    %64 = memref.load %arg2[%62, %63] : memref<2x8xi32, #tpu.memory_space<smem>>
    %65 = arith.index_cast %64 : i32 to index
    %c0_17 = arith.constant 0 : index
    %66 = vector.load %arg3[%65, %c0_17] : memref<64x128xf32, #tpu.memory_space<vmem>>, vector<1x128xf32>
    %c0_18 = arith.constant 0 : index
    %67 = arith.index_cast %c6_i32 : i32 to index
    %c0_19 = arith.constant 0 : index
    %68 = vector.load %arg8[%c0_18, %67, %c0_19] : memref<1x8x128xf32, #tpu.memory_space<vmem>>, vector<1x1x128xf32>
    %69 = vector.shape_cast %68 : vector<1x1x128xf32> to vector<1x128xf32>
    %70 = vector.shape_cast %66 : vector<1x128xf32> to vector<1x1x128xf32>
    tpu.vector_store %arg8[%c0_18, %67, %c0_19], %70 {strides = array<i32>} : memref<1x8x128xf32, #tpu.memory_space<vmem>>, vector<1x1x128xf32>,
    %c7_i32 = arith.constant 7 : i32
    %71 = arith.addi %0, %c7_i32 : i32
    %72 = arith.index_cast %arg1 : i32 to index
    %73 = arith.index_cast %71 : i32 to index
    %74 = memref.load %arg2[%72, %73] : memref<2x8xi32, #tpu.memory_space<smem>>
    %75 = arith.index_cast %74 : i32 to index
    %c0_20 = arith.constant 0 : index
    %76 = vector.load %arg3[%75, %c0_20] : memref<64x128xf32, #tpu.memory_space<vmem>>, vector<1x128xf32>
    %c0_21 = arith.constant 0 : index
    %77 = arith.index_cast %c7_i32 : i32 to index
    %c0_22 = arith.constant 0 : index
    %78 = vector.load %arg8[%c0_21, %77, %c0_22] : memref<1x8x128xf32, #tpu.memory_space<vmem>>, vector<1x1x128xf32>
    %79 = vector.shape_cast %78 : vector<1x1x128xf32> to vector<1x128xf32>
    %80 = vector.shape_cast %76 : vector<1x128xf32> to vector<1x1x128xf32>
    tpu.vector_store %arg8[%c0_21, %77, %c0_22], %80 {strides = array<i32>} : memref<1x8x128xf32, #tpu.memory_space<vmem>>, vector<1x1x128xf32>,
    %c8_i32_23 = arith.constant 8 : i32
    %c0_24 = arith.constant 0 : index
    %c0_25 = arith.constant 0 : index
    %c0_26 = arith.constant 0 : index
    %81 = vector.load %arg8[%c0_24, %c0_25, %c0_26] : memref<1x8x128xf32, #tpu.memory_space<vmem>>, vector<1x8x128xf32>
    %82 = vector.shape_cast %81 : vector<1x8x128xf32> to vector<8x128xf32>
    %c0_27 = arith.constant 0 : index
    %c0_28 = arith.constant 0 : index
    %83 = vector.load %arg4[%c0_27, %c0_28] : memref<8x128xf32, #tpu.memory_space<vmem>>, vector<8x128xf32>
    %84 = arith.addf %82, %83 : vector<8x128xf32>
    %cst = arith.constant dense<0.000000e+00> : vector<8xf32>
    %85 = vector.multi_reduction <add>, %84, %cst [1] : vector<8x128xf32> to vector<8xf32>
    %86 = vector.shape_cast %85 : vector<8xf32> to vector<8x1xf32>
    %cst_29 = arith.constant 7.812500e-03 : f32
    %87 = vector.broadcast %cst_29 : f32 to vector<8x1xf32>
    %88 = arith.mulf %86, %87 : vector<8x1xf32>
    %89 = vector.broadcast %88 : vector<8x1xf32> to vector<8x128xf32>
    %90 = arith.subf %84, %89 : vector<8x128xf32>
    %91 = arith.mulf %90, %90 : vector<8x128xf32>
    %cst_30 = arith.constant dense<0.000000e+00> : vector<8xf32>
    %92 = vector.multi_reduction <add>, %91, %cst_30 [1] : vector<8x128xf32> to vector<8xf32>
    %93 = vector.shape_cast %92 : vector<8xf32> to vector<8x1xf32>
    %cst_31 = arith.constant 7.812500e-03 : f32
    %94 = vector.broadcast %cst_31 : f32 to vector<8x1xf32>
    %95 = arith.mulf %93, %94 : vector<8x1xf32>
    %cst_32 = arith.constant 9.99999996E-13 : f32
    %96 = vector.broadcast %cst_32 : f32 to vector<8x1xf32>
    %97 = arith.addf %95, %96 : vector<8x1xf32>
    %98 = math.rsqrt %97 : vector<8x1xf32>
    %99 = vector.broadcast %98 : vector<8x1xf32> to vector<8x128xf32>
    %100 = arith.mulf %90, %99 : vector<8x128xf32>
    %c0_33 = arith.constant 0 : index
    %c0_34 = arith.constant 0 : index
    %101 = vector.load %arg5[%c0_33, %c0_34] : memref<1x128xf32, #tpu.memory_space<vmem>>, vector<1x128xf32>
    %102 = vector.broadcast %101 : vector<1x128xf32> to vector<8x128xf32>
    %103 = arith.mulf %100, %102 : vector<8x128xf32>
    %c0_35 = arith.constant 0 : index
    %c0_36 = arith.constant 0 : index
    %104 = vector.load %arg6[%c0_35, %c0_36] : memref<1x128xf32, #tpu.memory_space<vmem>>, vector<1x128xf32>
    %105 = vector.broadcast %104 : vector<1x128xf32> to vector<8x128xf32>
    %106 = arith.addf %103, %105 : vector<8x128xf32>
    %c0_37 = arith.constant 0 : index
    %c0_38 = arith.constant 0 : index
    %c0_39 = arith.constant 0 : index
    %107 = vector.load %arg7[%c0_37, %c0_38, %c0_39] : memref<1x8x128xf32, #tpu.memory_space<vmem>>, vector<1x8x128xf32>
    %108 = vector.shape_cast %107 : vector<1x8x128xf32> to vector<8x128xf32>
    %109 = vector.shape_cast %106 : vector<8x128xf32> to vector<1x8x128xf32>
    tpu.vector_store %arg7[%c0_37, %c0_38, %c0_39], %109 {strides = array<i32>} : memref<1x8x128xf32, #tpu.memory_space<vmem>>, vector<1x8x128xf32>,
    return
  }
  func.func @transform_0(%arg0: i32, %arg1: i32, %arg2: memref<2x8xi32, #tpu.memory_space<smem>>) -> (i32, i32) {
    %c0_i32 = arith.constant 0 : i32
    %c0_i32_0 = arith.constant 0 : i32
    %c0_i32_1 = arith.constant 0 : i32
    return %c0_i32, %c0_i32_0 : i32, i32
  }
  func.func @transform_1(%arg0: i32, %arg1: i32, %arg2: memref<2x8xi32, #tpu.memory_space<smem>>) -> (i32, i32) {
    %c0_i32 = arith.constant 0 : i32
    %c0_i32_0 = arith.constant 0 : i32
    return %arg0, %c0_i32 : i32, i32
  }
  func.func @transform_2(%arg0: i32, %arg1: i32, %arg2: memref<2x8xi32, #tpu.memory_space<smem>>) -> (i32, i32) {
    %c0_i32 = arith.constant 0 : i32
    %c0_i32_0 = arith.constant 0 : i32
    %c0_i32_1 = arith.constant 0 : i32
    return %c0_i32, %c0_i32_0 : i32, i32
  }
  func.func @transform_3(%arg0: i32, %arg1: i32, %arg2: memref<2x8xi32, #tpu.memory_space<smem>>) -> (i32, i32) {
    %c0_i32 = arith.constant 0 : i32
    %c0_i32_0 = arith.constant 0 : i32
    %c0_i32_1 = arith.constant 0 : i32
    return %c0_i32, %c0_i32_0 : i32, i32
  }
  func.func @transform_4(%arg0: i32, %arg1: i32, %arg2: memref<2x8xi32, #tpu.memory_space<smem>>) -> (i32, i32, i32) {
    %c0_i32 = arith.constant 0 : i32
    %c0_i32_0 = arith.constant 0 : i32
    return %arg1, %arg0, %c0_i32 : i32, i32, i32
  }
  func.func @transform_5(%arg0: i32, %arg1: i32, %arg2: memref<2x8xi32, #tpu.memory_space<smem>>) -> (i32, i32, i32) {
    %c0_i32 = arith.constant 0 : i32
    %c0_i32_0 = arith.constant 0 : i32
    return %arg1, %arg0, %c0_i32 : i32, i32, i32
  }
}

</mosaic_0001>

<llo_original>
// kernel: tpu_custom_call.1
$region0: #{tpu_custom_call.1}
  #allocation0 [shape = 'u32[]', space=smem, size = 0x4, offset = 0x4, fixed_abs, tag = 'smem constant byte address 0x4 - core index']
  #allocation1 [shape = 'u32[144,128]{1,0:T(1,128)}', space=vmem, size = 0x12000, scoped, tag = 'internal scratch']
  #allocation2 [shape = 's32[1]{0}', space=sflag, size = 0x4, scoped, tag = 'scoped memory for tpu_custom_call.1']
  #allocation3 [shape = 'u8[1024]{0}', space=smem, size = 0x400, scoped, tag = 'prefetched SMEM operand 0']
  %s0 = inlined_call_operand.hbm [shape: s32[2,8], index: 0, kind: input, shape index: {}]
  %s1 = inlined_call_operand.hbm [shape: f32[64,128], index: 1, kind: input, shape index: {}]
  %s2 = inlined_call_operand.hbm [shape: f32[8,128], index: 2, kind: input, shape index: {}]
  %s3 = inlined_call_operand.vmem [shape: f32[1,128], index: 3, kind: input, shape index: {}]
  %s4 = inlined_call_operand.vmem [shape: f32[1,128], index: 4, kind: input, shape index: {}]
  %s5 = inlined_call_operand.hbm [shape: f32[2,8,128], index: 5, kind: output, shape index: {0}]
  %s6 = inlined_call_operand.hbm [shape: f32[2,8,128], index: 6, kind: output, shape index: {1}]
  %7 = xla_tuple %s5, %s6
  %s8 = sld [smem:[#allocation0]]
  $region65: #{tpu_custom_call.1} parent=0
    _
  %s10 = ssub.s32 1, %s8
  %s11 = scalar_select 0, %s10, %s8
  %13 = dma.hbm_to_smem %s0, 32, [#allocation3], [#allocation2]
  %14 = dma.done [#allocation2], 32
  %15 = sfence
  $region1: #{tpu_custom_call.1} parent=0
    #allocation4 [shape = 'u8[32768]{0}', space=vmem, size = 0x8000, scoped, tag = 'input window, operand 1, single buffered']
    #allocation5 [shape = 's32[2]{0}', space=sflag, size = 0x8, scoped, tag = 'scoped memory for tpu_custom_call.1']
    #allocation6 [shape = 's32[2]{0}', space=sflag, size = 0x8, scoped, tag = 'scoped memory for tpu_custom_call.1']
    #allocation7 [shape = 'u8[4096]{0}', space=vmem, size = 0x1000, scoped, tag = 'input window, operand 2, single buffered']
    #allocation8 [shape = 's32[1]{0}', space=sflag, size = 0x4, scoped, tag = 'scoped memory for tpu_custom_call.1']
    #allocation9 [shape = 'u8[8192]{0}', space=vmem, size = 0x2000, scoped, tag = 'output window, operand 0']
    #allocation10 [shape = 'u8[8192]{0}', space=vmem, size = 0x2000, scoped, tag = 'output window, operand 1']
    #allocation11 [shape = 's32[2]{0}', space=sflag, size = 0x8, scoped, tag = 'scoped memory for tpu_custom_call.1']
    %16 = vsyncpa [#allocation5], 0
    %17 = vsyncpa [#allocation8], 0
    %18 = vsyncpa [#allocation6], 0
    %s19 = scalar_lea.sflag [#allocation6], 1
    %20 = vsyncpa %s19, 0
    %21 = vsyncpa [#allocation11], 0
    %s22 = scalar_lea.sflag [#allocation11], 1
    %23 = vsyncpa %s22, 0
    loop: start=0, step=1, limit=4
    $region2: #{tpu_custom_call.1} parent=1 // loop_pre_header
      _
    $region3: #{tpu_custom_call.1} parent=1 // loop_header
      %s25 = sphi 0, %s29
      %p26 = scmp.ge.s32.totalorder %s25, 4
      %s32 = sphi 0, %s44
      %s33 = sphi 0, %s40
      %s34 = sphi 0, %s32
      %s35 = sphi 0, %s33
      %s36 = sphi 0, %s34
      %s37 = sphi 0, %s35
      %s45 = sphi 0, %s45
      %s47 = sphi 0, %s45
      %s48 = sphi 0, %s47
      %s62 = sphi 0, %s48
      %s68 = sphi 0, %s70
      %s71 = sphi 0, %s68
      %s72 = sphi 0, %s71
      %s88 = sphi 0, %s72
      %s92 = sphi 0, %s92
      %s94 = sphi 0, %s92
      %s95 = sphi 0, %s94
      %s109 = sphi 0, %s95
      %s113 = sphi 0, %s113
      %s115 = sphi 0, %s113
      %s116 = sphi 0, %s115
      %s130 = sphi 0, %s116
      %s138 = sphi 0, %s140
      %s141 = sphi 0, %s138
      %s142 = sphi 0, %s141
      %s158 = sphi 0, %s142
      %s166 = sphi 0, %s168
      %s169 = sphi 0, %s166
      %s170 = sphi 0, %s169
      %s186 = sphi 0, %s170
    $region4: #{tpu_custom_call.1} parent=1 // loop_header_branch
      %28 = sbr.rel (%p26) target = $region8
    $region5: #{tpu_custom_call.1} parent=1 // loop_body
      %s30 = ssub.s32 %s25, 1
      %s31 = ssub.s32 %s25, 2
      %s38 = sadd.s32 1, %s33
      %p39 = scmp.ge.s32.totalorder %s38, 2
      %s40 = scalar_select %p39, 0, %s38
      %s41 = sadd.s32 1, %s32
      %s42 = scalar_select %p39, %s41, %s32
      %p43 = scmp.ge.s32.totalorder %s42, 1
      %s44 = scalar_select %p43, 0, %s42
      %s46 = sadd.s32 %s45, 1
      %p49 = scmp.eq.s32.totalorder %s25, 1
      %p50 = scmp.ne.s32.totalorder %s45, %s47
      %p51 = scmp.eq.s32.totalorder %s25, 0
      %p52 = por %p50, %p51
      %p53 = scmp.ne.s32.totalorder %s45, %s47
      %p54 = scmp.eq.s32.totalorder %s30, 1
      %p55 = por %p53, %p54
      %p56 = scmp.ne.s32.totalorder %s47, %s48
      %p57 = scmp.eq.s32.totalorder %s30, 0
      %p58 = por %p56, %p57
      %p59 = scmp.ne.s32.totalorder %s47, %s48
      %p60 = scmp.eq.s32.totalorder %s31, 1
      %p61 = por %p59, %p60
      %p63 = scmp.ne.s32.totalorder %s48, %s62
      %p64 = scmp.eq.s32.totalorder %s31, 0
      %p65 = por %p63, %p64
      %s66 = ssub.s32 %s32, %s44
      %p67 = scmp.eq.s32.totalorder %s66, 0
      %s69 = sadd.s32 %s68, 1
      %s70 = scalar_select %p67, %s68, %s69
      %p73 = pneg %p67
      %p74 = scmp.eq.s32.totalorder %s25, 1
      %p75 = por %p73, %p74
      %p76 = scmp.ne.s32.totalorder %s68, %s71
      %p77 = scmp.eq.s32.totalorder %s25, 0
      %p78 = por %p76, %p77
      %p79 = scmp.ne.s32.totalorder %s68, %s71
      %p80 = scmp.eq.s32.totalorder %s30, 1
      %p81 = por %p79, %p80
      %p82 = scmp.ne.s32.totalorder %s71, %s72
      %p83 = scmp.eq.s32.totalorder %s30, 0
      %p84 = por %p82, %p83
      %p85 = scmp.ne.s32.totalorder %s71, %s72
      %p86 = scmp.eq.s32.totalorder %s31, 1
      %p87 = por %p85, %p86
      %p89 = scmp.ne.s32.totalorder %s72, %s88
      %p90 = scmp.eq.s32.totalorder %s31, 0
      %p91 = por %p89, %p90
      %s93 = sadd.s32 %s92, 1
      %p96 = scmp.eq.s32.totalorder %s25, 1
      %p97 = scmp.ne.s32.totalorder %s92, %s94
      %p98 = scmp.eq.s32.totalorder %s25, 0
      %p99 = por %p97, %p98
      %p100 = scmp.ne.s32.totalorder %s92, %s94
      %p101 = scmp.eq.s32.totalorder %s30, 1
      %p102 = por %p100, %p101
      %p103 = scmp.ne.s32.totalorder %s94, %s95
      %p104 = scmp.eq.s32.totalorder %s30, 0
      %p105 = por %p103, %p104
      %p106 = scmp.ne.s32.totalorder %s94, %s95
      %p107 = scmp.eq.s32.totalorder %s31, 1
      %p108 = por %p106, %p107
      %p110 = scmp.ne.s32.totalorder %s95, %s109
      %p111 = scmp.eq.s32.totalorder %s31, 0
      %p112 = por %p110, %p111
      %s114 = sadd.s32 %s113, 1
      %p117 = scmp.eq.s32.totalorder %s25, 1
      %p118 = scmp.ne.s32.totalorder %s113, %s115
      %p119 = scmp.eq.s32.totalorder %s25, 0
      %p120 = por %p118, %p119
      %p121 = scmp.ne.s32.totalorder %s113, %s115
      %p122 = scmp.eq.s32.totalorder %s30, 1
      %p123 = por %p121, %p122
      %p124 = scmp.ne.s32.totalorder %s115, %s116
      %p125 = scmp.eq.s32.totalorder %s30, 0
      %p126 = por %p124, %p125
      %p127 = scmp.ne.s32.totalorder %s115, %s116
      %p128 = scmp.eq.s32.totalorder %s31, 1
      %p129 = por %p127, %p128
      %p131 = scmp.ne.s32.totalorder %s116, %s130
      %p132 = scmp.eq.s32.totalorder %s31, 0
      %p133 = por %p131, %p132
      %s134 = ssub.s32 %s33, %s40
      %s135 = ssub.s32 %s32, %s44
      %s136 = sor.u32 %s134, %s135
      %p137 = scmp.eq.s32.totalorder %s136, 0
      %s139 = sadd.s32 %s138, 1
      %s140 = scalar_select %p137, %s138, %s139
      %p143 = pneg %p137
      %p144 = scmp.eq.s32.totalorder %s25, 1
      %p145 = por %p143, %p144
      %p146 = scmp.ne.s32.totalorder %s138, %s141
      %p147 = scmp.eq.s32.totalorder %s25, 0
      %p148 = por %p146, %p147
      %p149 = scmp.ne.s32.totalorder %s138, %s141
      %p150 = scmp.eq.s32.totalorder %s30, 1
      %p151 = por %p149, %p150
      %p152 = scmp.ne.s32.totalorder %s141, %s142
      %p153 = scmp.eq.s32.totalorder %s30, 0
      %p154 = por %p152, %p153
      %p155 = scmp.ne.s32.totalorder %s141, %s142
      %p156 = scmp.eq.s32.totalorder %s31, 1
      %p157 = por %p155, %p156
      %p159 = scmp.ne.s32.totalorder %s142, %s158
      %p160 = scmp.eq.s32.totalorder %s31, 0
      %p161 = por %p159, %p160
      %s162 = ssub.s32 %s33, %s40
      %s163 = ssub.s32 %s32, %s44
      %s164 = sor.u32 %s162, %s163
      %p165 = scmp.eq.s32.totalorder %s164, 0
      %s167 = sadd.s32 %s166, 1
      %s168 = scalar_select %p165, %s166, %s167
      %p171 = pneg %p165
      %p172 = scmp.eq.s32.totalorder %s25, 1
      %p173 = por %p171, %p172
      %p174 = scmp.ne.s32.totalorder %s166, %s169
      %p175 = scmp.eq.s32.totalorder %s25, 0
      %p176 = por %p174, %p175
      %p177 = scmp.ne.s32.totalorder %s166, %s169
      %p178 = scmp.eq.s32.totalorder %s30, 1
      %p179 = por %p177, %p178
      %p180 = scmp.ne.s32.totalorder %s169, %s170
      %p181 = scmp.eq.s32.totalorder %s30, 0
      %p182 = por %p180, %p181
      %p183 = scmp.ne.s32.totalorder %s169, %s170
      %p184 = scmp.eq.s32.totalorder %s31, 1
      %p185 = por %p183, %p184
      %p187 = scmp.ne.s32.totalorder %s170, %s186
      %p188 = scmp.eq.s32.totalorder %s31, 0
      %p189 = por %p187, %p188
      %p190 = scmp.le.s32.totalorder 1, %s25
      %p191 = scmp.lt.s32.totalorder %s25, 3
      %p192 = pnand %p190, %p191
      %p193 = pneg %p192
      // Predicated region
      $region9: #{tpu_custom_call.1} parent=5 // pred_check
        _
      $region10: #{tpu_custom_call.1} parent=5 // pred_check_branch
        %195 = sbr.rel (%p192) target = $region12
      $region11: #{tpu_custom_call.1} parent=5 // pred_region
        %s196 = ssub.s32 %s25, 1
        // Predicated region
        $region13: #{tpu_custom_call.1} parent=11 // pred_check
          %p197 = pneg %p58
        $region14: #{tpu_custom_call.1} parent=11 // pred_check_branch
          %199 = sbr.rel (%p197) target = $region16
        $region15: #{tpu_custom_call.1} parent=11 // pred_region
          %s201 = ssub.s32 1024, 1024
          %202 = vsyncadd [#allocation5], %s201
          %s203 = sshll.u32 [#allocation4], 4
          %s204 = int_to_ptr.vmem [resolvable:$true] %s203
          %209 = dma.hbm_to_vmem [thread:$0]  %s1, 1024, %s204, [#allocation5], 128, 128, 8
        $region16: #{tpu_custom_call.1} parent=11 // pred_fallthru
          _
        // Predicated region
        $region17: #{tpu_custom_call.1} parent=11 // pred_check
          %p210 = pneg %p84
        $region18: #{tpu_custom_call.1} parent=11 // pred_check_branch
          %212 = sbr.rel (%p210) target = $region20
        $region19: #{tpu_custom_call.1} parent=11 // pred_region
          %s214 = ssub.s32 128, 128
          %215 = vsyncadd [#allocation8], %s214
          %s216 = smul.addr %s34, 128
          %s217 = scalar_lea.hbm %s2, %s216
          %s219 = sshll.u32 [#allocation7], 4
          %s220 = int_to_ptr.vmem [resolvable:$true] %s219
          %222 = dma.hbm_to_vmem [thread:$0]  %s217, 128, %s220, [#allocation8]
        $region20: #{tpu_custom_call.1} parent=11 // pred_fallthru
          _
        // Predicated region
        $region21: #{tpu_custom_call.1} parent=11 // pred_check
          %p223 = pneg %p105
        $region22: #{tpu_custom_call.1} parent=11 // pred_check_branch
          %225 = sbr.rel (%p223) target = $region24
        $region23: #{tpu_custom_call.1} parent=11 // pred_region
          _
        $region24: #{tpu_custom_call.1} parent=11 // pred_fallthru
          _
        // Predicated region
        $region25: #{tpu_custom_call.1} parent=11 // pred_check
          %p226 = pneg %p126
        $region26: #{tpu_custom_call.1} parent=11 // pred_check_branch
          %228 = sbr.rel (%p226) target = $region28
        $region27: #{tpu_custom_call.1} parent=11 // pred_region
          _
        $region28: #{tpu_custom_call.1} parent=11 // pred_fallthru
          _
      $region12: #{tpu_custom_call.1} parent=5 // pred_fallthru
        _
      %p229 = scmp.lt.s32.totalorder %s25, 2
      // Predicated region
      $region29: #{tpu_custom_call.1} parent=5 // pred_check
        %p230 = pneg %p229
      $region30: #{tpu_custom_call.1} parent=5 // pred_check_branch
        %232 = sbr.rel (%p230) target = $region32
      $region31: #{tpu_custom_call.1} parent=5 // pred_region
        _
      $region32: #{tpu_custom_call.1} parent=5 // pred_fallthru
        _
      %p233 = scmp.le.s32.totalorder 1, %s25
      %p234 = scmp.lt.s32.totalorder %s25, 3
      %p235 = pnand %p233, %p234
      %p236 = pneg %p235
      // Predicated region
      $region33: #{tpu_custom_call.1} parent=5 // pred_check
        _
      $region34: #{tpu_custom_call.1} parent=5 // pred_check_branch
        %238 = sbr.rel (%p235) target = $region36
      $region35: #{tpu_custom_call.1} parent=5 // pred_region
        %s239 = ssub.s32 %s25, 1
        // Predicated region
        $region37: #{tpu_custom_call.1} parent=35 // pred_check
          %p240 = pneg %p58
        $region38: #{tpu_custom_call.1} parent=35 // pred_check_branch
          %242 = sbr.rel (%p240) target = $region40
        $region39: #{tpu_custom_call.1} parent=35 // pred_region
          %243 = dma.done [#allocation5], 1024
        $region40: #{tpu_custom_call.1} parent=35 // pred_fallthru
          _
        // Predicated region
        $region41: #{tpu_custom_call.1} parent=35 // pred_check
          %p244 = pneg %p84
        $region42: #{tpu_custom_call.1} parent=35 // pred_check_branch
          %246 = sbr.rel (%p244) target = $region44
        $region43: #{tpu_custom_call.1} parent=35 // pred_region
          %247 = dma.done [#allocation8], 128
        $region44: #{tpu_custom_call.1} parent=35 // pred_fallthru
          _
        %p248 = pneg %p58
        %p249 = pneg %p55
        %p250 = pneg %p84
        %p251 = pneg %p81
        %p252 = pneg %p105
        %p253 = pneg %p102
        %p254 = pneg %p126
        %p255 = pneg %p123
        %p256 = pneg %p154
        %p257 = pneg %p151
        %s258 = sand.u32 %s141, 1
        %s259 = scalar_lea.sflag [#allocation6], %s258
        %s260 = sand.u32 %s141, 1
        %s261 = smul.addr %s260, 8
        %s262 = scalar_lea.vmem [#allocation9], %s261
        %p263 = pneg %p182
        %p264 = pneg %p179
        %s265 = sand.u32 %s169, 1
        %s266 = scalar_lea.sflag [#allocation11], %s265
        %s267 = sand.u32 %s169, 1
        %s268 = smul.addr %s267, 8
        %s269 = scalar_lea.vmem [#allocation10], %s268
        %s270 = smul.u32 %s34, 8
        %s271 = sshra.s32 %s270, 7
        %s272 = sand.u32 %s270, 127
        %s273 = sadd.s32 %s271, %s35
        %s274 = smul.u32 %s273, 128
        %s275 = sshra.s32 %s270, 7
        %s276 = sand.u32 %s270, 127
        %s277 = sadd.s32 %s274, %s276
        %s278 = sld [smem:[#allocation3 + %s277]]
        %s279 = scalar_lea.vmem [#allocation4], %s278
        %v280 = vld [vmem:[%s279] sm:$0x1]
        %281 = vst [vmem:[%s269] sm:$0x1] %v280
        %s282 = sadd.s32 %s270, 1
        %s283 = sshra.s32 %s282, 7
        %s284 = sand.u32 %s282, 127
        %s285 = sadd.s32 %s283, %s35
        %s286 = smul.u32 %s285, 128
        %s287 = sshra.s32 %s282, 7
        %s288 = sand.u32 %s282, 127
        %s289 = sadd.s32 %s286, %s288
        %s290 = sld [smem:[#allocation3 + %s289]]
        %s291 = scalar_lea.vmem [#allocation4], %s290
        %v292 = vld [vmem:[%s291] sm:$0x1]
        %293 = vst [vmem:[%s269 + $0x1] sm:$0x1] %v292
        %s294 = sadd.s32 %s270, 2
        %s295 = sshra.s32 %s294, 7
        %s296 = sand.u32 %s294, 127
        %s297 = sadd.s32 %s295, %s35
        %s298 = smul.u32 %s297, 128
        %s299 = sshra.s32 %s294, 7
        %s300 = sand.u32 %s294, 127
        %s301 = sadd.s32 %s298, %s300
        %s302 = sld [smem:[#allocation3 + %s301]]
        %s303 = scalar_lea.vmem [#allocation4], %s302
        %v304 = vld [vmem:[%s303] sm:$0x1]
        %305 = vst [vmem:[%s269 + $0x2] sm:$0x1] %v304
        %s306 = sadd.s32 %s270, 3
        %s307 = sshra.s32 %s306, 7
        %s308 = sand.u32 %s306, 127
        %s309 = sadd.s32 %s307, %s35
        %s310 = smul.u32 %s309, 128
        %s311 = sshra.s32 %s306, 7
        %s312 = sand.u32 %s306, 127
        %s313 = sadd.s32 %s310, %s312
        %s314 = sld [smem:[#allocation3 + %s313]]
        %s315 = scalar_lea.vmem [#allocation4], %s314
        %v316 = vld [vmem:[%s315] sm:$0x1]
        %317 = vst [vmem:[%s269 + $0x3] sm:$0x1] %v316
        %s318 = sadd.s32 %s270, 4
        %s319 = sshra.s32 %s318, 7
        %s320 = sand.u32 %s318, 127
        %s321 = sadd.s32 %s319, %s35
        %s322 = smul.u32 %s321, 128
        %s323 = sshra.s32 %s318, 7
        %s324 = sand.u32 %s318, 127
        %s325 = sadd.s32 %s322, %s324
        %s326 = sld [smem:[#allocation3 + %s325]]
        %s327 = scalar_lea.vmem [#allocation4], %s326
        %v328 = vld [vmem:[%s327] sm:$0x1]
        %329 = vst [vmem:[%s269 + $0x4] sm:$0x1] %v328
        %s330 = sadd.s32 %s270, 5
        %s331 = sshra.s32 %s330, 7
        %s332 = sand.u32 %s330, 127
        %s333 = sadd.s32 %s331, %s35
        %s334 = smul.u32 %s333, 128
        %s335 = sshra.s32 %s330, 7
        %s336 = sand.u32 %s330, 127
        %s337 = sadd.s32 %s334, %s336
        %s338 = sld [smem:[#allocation3 + %s337]]
        %s339 = scalar_lea.vmem [#allocation4], %s338
        %v340 = vld [vmem:[%s339] sm:$0x1]
        %341 = vst [vmem:[%s269 + $0x5] sm:$0x1] %v340
        %s342 = sadd.s32 %s270, 6
        %s343 = sshra.s32 %s342, 7
        %s344 = sand.u32 %s342, 127
        %s345 = sadd.s32 %s343, %s35
        %s346 = smul.u32 %s345, 128
        %s347 = sshra.s32 %s342, 7
        %s348 = sand.u32 %s342, 127
        %s349 = sadd.s32 %s346, %s348
        %s350 = sld [smem:[#allocation3 + %s349]]
        %s351 = scalar_lea.vmem [#allocation4], %s350
        %v352 = vld [vmem:[%s351] sm:$0x1]
        %353 = vst [vmem:[%s269 + $0x6] sm:$0x1] %v352
        %s354 = sadd.s32 %s270, 7
        %s355 = sshra.s32 %s354, 7
        %s356 = sand.u32 %s354, 127
        %s357 = sadd.s32 %s355, %s35
        %s358 = smul.u32 %s357, 128
        %s359 = sshra.s32 %s354, 7
        %s360 = sand.u32 %s354, 127
        %s361 = sadd.s32 %s358, %s360
        %s362 = sld [smem:[#allocation3 + %s361]]
        %s363 = scalar_lea.vmem [#allocation4], %s362
        %v364 = vld [vmem:[%s363] sm:$0x1]
        %365 = vst [vmem:[%s269 + $0x7] sm:$0x1] %v364
        %v366 = vld [vmem:[%s269] sm:$0xff]
        %v367 = vld [vmem:[#allocation7] sm:$0xff]
        %v368 = vadd.f32 %v366, %v367
        %369 = vadd.xlane.f32.xlu0 %v368
        %v370 = vpop.xlane.xlu0 %369
        %v371 = vmul.f32 %v370, 0.0078125
        %v372 = vsub.f32 %v368, %v371
        %v373 = vmul.f32 %v372, %v372
        %374 = vadd.xlane.f32.xlu0 %v373
        %v375 = vpop.xlane.xlu0 %374
        %v376 = vmul.f32 %v375, 0.0078125
        %v377 = vadd.f32 %v376, 1e-12
        %v378 = vrsqrt.pop %v377
        %v379 = vmul.f32 %v372, %v378
        %v380 = vld [vmem:[%s3] sm:$0x1]
        %v382 = vlaneseq
        %v383 = vshrl.u32 %v382, 7
        %v384 = vsub.s32 0, %v383
        %v385 = vrot.slane %v380, %v384
        %v387 = vmul.f32 %v379, %v385
        %v388 = vld [vmem:[%s4] sm:$0x1]
        %v390 = vlaneseq
        %v391 = vshrl.u32 %v390, 7
        %v392 = vsub.s32 0, %v391
        %v393 = vrot.slane %v388, %v392
        %v395 = vadd.f32 %v387, %v393
        %396 = vst [vmem:[%s262] sm:$0xff] %v395
        %s397 = sand.u32 %s141, 1
        %s398 = scalar_lea.sflag [#allocation6], %s397
        %s399 = sand.u32 %s141, 1
        %s400 = smul.addr %s399, 8
        %s401 = scalar_lea.vmem [#allocation9], %s400
        %s402 = sand.u32 %s169, 1
        %s403 = scalar_lea.sflag [#allocation11], %s402
        %s404 = sand.u32 %s169, 1
        %s405 = smul.addr %s404, 8
        %s406 = scalar_lea.vmem [#allocation10], %s405
        // Predicated region
        $region45: #{tpu_custom_call.1} parent=35 // pred_check
          %p407 = pneg %p151
        $region46: #{tpu_custom_call.1} parent=35 // pred_check_branch
          %409 = sbr.rel (%p407) target = $region48
        $region47: #{tpu_custom_call.1} parent=35 // pred_region
          %s411 = ssub.s32 128, 128
          %412 = vsyncadd %s398, %s411
          %s413 = sadd.s32 %s34, %s35
          %s414 = smul.addr %s413, 128
          %s415 = scalar_lea.hbm %s5, %s414
          %s417 = sshll.u32 %s401, 4
          %s418 = int_to_ptr.vmem [resolvable:$true] %s417
          %420 = dma.vmem_to_hbm [thread:$0]  %s418, 128, %s415, %s398
        $region48: #{tpu_custom_call.1} parent=35 // pred_fallthru
          _
        // Predicated region
        $region49: #{tpu_custom_call.1} parent=35 // pred_check
          %p421 = pneg %p179
        $region50: #{tpu_custom_call.1} parent=35 // pred_check_branch
          %423 = sbr.rel (%p421) target = $region52
        $region51: #{tpu_custom_call.1} parent=35 // pred_region
          %s425 = ssub.s32 128, 128
          %426 = vsyncadd %s403, %s425
          %s427 = sadd.s32 %s34, %s35
          %s428 = smul.addr %s427, 128
          %s429 = scalar_lea.hbm %s6, %s428
          %s431 = sshll.u32 %s406, 4
          %s432 = int_to_ptr.vmem [resolvable:$true] %s431
          %434 = dma.vmem_to_hbm [thread:$0]  %s432, 128, %s429, %s403
        $region52: #{tpu_custom_call.1} parent=35 // pred_fallthru
          _
      $region36: #{tpu_custom_call.1} parent=5 // pred_fallthru
        _
      %p435 = scmp.le.s32.totalorder 2, %s25
      // Predicated region
      $region53: #{tpu_custom_call.1} parent=5 // pred_check
        %p436 = pneg %p435
      $region54: #{tpu_custom_call.1} parent=5 // pred_check_branch
        %438 = sbr.rel (%p436) target = $region56
      $region55: #{tpu_custom_call.1} parent=5 // pred_region
        %s439 = ssub.s32 %s25, 2
        // Predicated region
        $region57: #{tpu_custom_call.1} parent=55 // pred_check
          %p440 = pneg %p157
        $region58: #{tpu_custom_call.1} parent=55 // pred_check_branch
          %442 = sbr.rel (%p440) target = $region60
        $region59: #{tpu_custom_call.1} parent=55 // pred_region
          %s443 = sand.u32 %s142, 1
          %s444 = scalar_lea.sflag [#allocation6], %s443
          %s445 = sand.u32 %s142, 1
          %s446 = smul.addr %s445, 8
          %s447 = scalar_lea.vmem [#allocation9], %s446
          %448 = dma.done %s444, 128
        $region60: #{tpu_custom_call.1} parent=55 // pred_fallthru
          _
        // Predicated region
        $region61: #{tpu_custom_call.1} parent=55 // pred_check
          %p449 = pneg %p185
        $region62: #{tpu_custom_call.1} parent=55 // pred_check_branch
          %451 = sbr.rel (%p449) target = $region64
        $region63: #{tpu_custom_call.1} parent=55 // pred_region
          %s452 = sand.u32 %s170, 1
          %s453 = scalar_lea.sflag [#allocation11], %s452
          %s454 = sand.u32 %s170, 1
          %s455 = smul.addr %s454, 8
          %s456 = scalar_lea.vmem [#allocation10], %s455
          %457 = dma.done %s453, 128
        $region64: #{tpu_custom_call.1} parent=55 // pred_fallthru
          _
      $region56: #{tpu_custom_call.1} parent=5 // pred_fallthru
        _
    $region6: #{tpu_custom_call.1} parent=1 // loop_footer
      %s29 = sadd.s32 1, %s25
    $region7: #{tpu_custom_call.1} parent=1 // loop_footer_branch
      %24 = sbr.rel target = $region3
    $region8: #{tpu_custom_call.1} parent=1 // loop_exit
      _
    %458 = vsyncpa [#allocation5], 1
    %s459 = scalar_lea.sflag [#allocation5], 1
    %460 = vsyncpa %s459, 1
    %461 = vsyncpa [#allocation8], 1
    %462 = vsyncpa [#allocation6], 1
    %s463 = scalar_lea.sflag [#allocation6], 1
    %464 = vsyncpa %s463, 1
    %465 = vsyncpa [#allocation11], 1
    %s466 = scalar_lea.sflag [#allocation11], 1
    %467 = vsyncpa %s466, 1

</llo_original>
